<compile_context>
chip_gen: v6e
topology: v6e:2x2x1
jax: 0.10.0
libtpu: 0.0.40
codegen_flags: <defaults>
</compile_context>

<pallas_src>
import functools
import math

import jax
import jax.numpy as jnp
from jax.experimental import pallas as pl
from jax.experimental.pallas import tpu as pltpu

_INV_SQRT2 = 1.0 / math.sqrt(2.0)


def _gelu_exact(h):
    # torch.nn.GELU() default (erf formulation), computed in f32.
    return 0.5 * h * (1.0 + jax.lax.erf(h * _INV_SQRT2))


def _round_up(x, m):
    return ((x + m - 1) // m) * m


def _vmem_budget_bytes():
    """~75% of physical VMEM (leaves room for compiler-internal scratch)."""
    cap = 64 << 20  # conservative fallback (v7x per-TC VMEM)
    try:
        info = pltpu.get_tpu_info()
        cap = int(getattr(info, "vmem_capacity_bytes", cap))
    except Exception:
        pass
    return (cap * 3) // 4


# ---------------------------------------------------------------------------
# Fast path kernel: both weights VMEM-resident, 1-D grid over token tiles.
# ---------------------------------------------------------------------------
def _ffn_resident_kernel(x_ref, w1_ref, w2_ref, o_ref):
    h = jnp.dot(x_ref[...], w1_ref[...], preferred_element_type=jnp.float32)
    h = _gelu_exact(h)
    o_ref[...] = jnp.dot(h.astype(w2_ref.dtype), w2_ref[...],
                         preferred_element_type=jnp.float32).astype(o_ref.dtype)


# ---------------------------------------------------------------------------
# Tiled path kernel: 2-D grid (token tiles, F tiles); F axis is a reduction.
# ---------------------------------------------------------------------------
def _ffn_tiled_kernel(x_ref, w1_ref, w2_ref, o_ref, *scratch,
                      tf, f_last_valid, use_scratch):
    k = pl.program_id(1)
    nk = pl.num_programs(1)
    acc_ref = scratch[0] if use_scratch else o_ref  # f32 out: accumulate in place

    @pl.when(k == 0)
    def _():
        acc_ref[...] = jnp.zeros_like(acc_ref)

    w1 = w1_ref[...]
    w2 = w2_ref[...]
    if f_last_valid != tf:
        # Partial final F tile: zero padded W1 columns / W2 rows so the
        # unspecified padded block contents cannot pollute the accumulator.
        valid = jnp.where(k == nk - 1, f_last_valid, tf)
        col = jax.lax.broadcasted_iota(jnp.int32, (1, tf), 1)
        row = jax.lax.broadcasted_iota(jnp.int32, (tf, 1), 0)
        w1 = jnp.where(col < valid, w1, jnp.zeros_like(w1))
        w2 = jnp.where(row < valid, w2, jnp.zeros_like(w2))

    h = jnp.dot(x_ref[...], w1, preferred_element_type=jnp.float32)
    h = _gelu_exact(h)
    acc_ref[...] += jnp.dot(h.astype(w2.dtype), w2,
                            preferred_element_type=jnp.float32)

    if use_scratch:
        @pl.when(k == nk - 1)
        def _():
            o_ref[...] = acc_ref[...].astype(o_ref.dtype)


# ---------------------------------------------------------------------------
# Wrapper
# ---------------------------------------------------------------------------
def feed_forward(x, w1t, w2t, *, tile_m=None, tile_f=None, force_tiled=False):
    """x: [B, S, d_model]; w1t: [d_model, F]; w2t: [F, d_model] -> [B, S, d_model]."""
    B, S, D = x.shape
    F = w1t.shape[1]
    assert w1t.shape == (D, F) and w2t.shape == (F, D)
    M = B * S
    x2 = x.reshape(M, D)

    in_size = jnp.dtype(x.dtype).itemsize
    w_size = jnp.dtype(w1t.dtype).itemsize
    out_size = in_size

    budget = _vmem_budget_bytes()
    headroom = 4 << 20
    multi_tc_hint = budget <= (52 << 20)  # ~v7x: 64 MiB physical VMEM per TC

    flops = 4 * M * D * F
    transcendentals = M * F
    io_bytes = M * D * (in_size + out_size)
    w_bytes = 2 * D * F * w_size  # W1 + W2, single copy each

    # -------------------- fast path: weights VMEM-resident -----------------
    if not force_tiled and 2 * w_bytes <= budget // 2:
        tm = M

        def fits(tm_):
            work = (2 * tm_ * D * in_size + 2 * tm_ * D * out_size
                    + tm_ * F * 4 + tm_ * F * w_size)  # f32 GELU interm + cast
            return 2 * w_bytes + work + headroom <= budget

        while tm > 8 and not fits(tm):
            tm = _round_up(tm // 2, 8)
        if multi_tc_hint and M >= 16 and pl.cdiv(M, tm) < 2:
            tm = max(8, _round_up(-(-M // 2), 8))  # give both v7x TCs work

        out2 = pl.pallas_call(
            _ffn_resident_kernel,
            out_shape=jax.ShapeDtypeStruct((M, D), x.dtype),
            grid_spec=pltpu.PrefetchScalarGridSpec(
                num_scalar_prefetch=0,
                grid=(pl.cdiv(M, tm),),
                in_specs=[
                    pl.BlockSpec((tm, D), lambda i: (i, 0)),   # token tile
                    pl.BlockSpec((D, F), lambda i: (0, 0)),    # W1^T resident
                    pl.BlockSpec((F, D), lambda i: (0, 0)),    # W2^T resident
                ],
                out_specs=pl.BlockSpec((tm, D), lambda i: (i, 0)),
            ),
            compiler_params=pltpu.CompilerParams(
                dimension_semantics=("parallel",),
                vmem_limit_bytes=int(budget),
            ),
            cost_estimate=pl.CostEstimate(
                flops=flops, transcendentals=transcendentals,
                bytes_accessed=io_bytes + w_bytes),
        )(x2, w1t, w2t)
        return out2.reshape(B, S, D)

    # -------------------- tiled path: stream weights along F ---------------
    use_scratch = jnp.dtype(x.dtype) != jnp.dtype(jnp.float32)
    tm = tile_m if tile_m is not None else (1024 if budget >= (80 << 20) else 512)
    tf = tile_f if tile_f is not None else (512 if D < 8192 else 256)
    tm = tm if tm < M else M
    tf = tf if tf < F else F

    def tiled_bytes(tm_, tf_):
        return (2 * tm_ * D * in_size            # x tile (double buffered)
                + 2 * D * tf_ * w_size           # W1^T column tile
                + 2 * tf_ * D * w_size           # W2^T row tile
                + 2 * tm_ * D * out_size         # out tile
                + (tm_ * D * 4 if use_scratch else 0)   # f32 accumulator
                + tm_ * tf_ * 4 + tm_ * tf_ * w_size)   # GELU interm + cast

    if tile_m is None or tile_f is None:
        # Shrink tf first (keeps tm, i.e. weight-streaming intensity, high).
        while tiled_bytes(tm, tf) + headroom > budget and tf > 128:
            tf = max(128, _round_up(tf // 2, 128))
        while tiled_bytes(tm, tf) + headroom > budget and tm > 8:
            tm = _round_up(tm // 2, 8)
    if multi_tc_hint and M >= 16 and pl.cdiv(M, tm) < 2:
        tm = max(8, _round_up(-(-M // 2), 8))

    nk = pl.cdiv(F, tf)
    f_last_valid = F - (nk - 1) * tf

    kernel = functools.partial(_ffn_tiled_kernel, tf=tf,
                               f_last_valid=f_last_valid,
                               use_scratch=use_scratch)
    scratch_shapes = ([pltpu.VMEM((tm, D), jnp.float32)] if use_scratch else [])

    out2 = pl.pallas_call(
        kernel,
        out_shape=jax.ShapeDtypeStruct((M, D), x.dtype),
        grid_spec=pltpu.PrefetchScalarGridSpec(
            num_scalar_prefetch=0,
            grid=(pl.cdiv(M, tm), nk),
            in_specs=[
                pl.BlockSpec((tm, D), lambda i, k: (i, 0)),   # token tile (resident over k)
                pl.BlockSpec((D, tf), lambda i, k: (0, k)),   # W1^T column tile
                pl.BlockSpec((tf, D), lambda i, k: (k, 0)),   # W2^T row tile
            ],
            out_specs=pl.BlockSpec((tm, D), lambda i, k: (i, 0)),
            scratch_shapes=scratch_shapes,
        ),
        compiler_params=pltpu.CompilerParams(
            dimension_semantics=("parallel", "arbitrary"),
            vmem_limit_bytes=int(budget),
        ),
        cost_estimate=pl.CostEstimate(
            flops=flops, transcendentals=transcendentals,
            bytes_accessed=io_bytes + pl.cdiv(M, tm) * w_bytes),
    )(x2, w1t, w2t)
    return out2.reshape(B, S, D)


def _reference(x, w1t, w2t):
    h = x.astype(jnp.float32) @ w1t.astype(jnp.float32)
    h = 0.5 * h * (1.0 + jax.lax.erf(h * _INV_SQRT2))
    return h @ w2t.astype(jnp.float32)


if __name__ == "__main__":
    key = jax.random.PRNGKey(0)

    # ---- Test 1: small shapes, fast (weight-resident) path ----------------
    batch, seq, d_model, dim_feedforward = 2, 8, 32, 64
    kx, k1, k2, kx2, k3, k4 = jax.random.split(key, 6)

    x = jax.random.normal(kx, (batch, seq, d_model), dtype=jnp.float32)
    w1 = jax.random.normal(k1, (dim_feedforward, d_model), dtype=jnp.float32) * (
        1.0 / math.sqrt(d_model))
    w2 = jax.random.normal(k2, (d_model, dim_feedforward), dtype=jnp.float32) * (
        1.0 / math.sqrt(dim_feedforward))
    w1t, w2t = w1.T, w2.T

    out = jax.block_until_ready(feed_forward(x, w1t, w2t))
    ref = _reference(x, w1t, w2t)
    assert out.shape == (batch, seq, d_model)
    assert jnp.allclose(out, ref.astype(out.dtype), atol=1e-4, rtol=1e-4), \
        "f32 fast-path mismatch vs reference"

    out_bf16 = jax.block_until_ready(
        feed_forward(x.astype(jnp.bfloat16), w1t.astype(jnp.bfloat16),
                     w2t.astype(jnp.bfloat16)))
    assert jnp.allclose(out_bf16.astype(jnp.float32), ref, atol=1e-1, rtol=1e-1), \
        "bf16 fast-path mismatch vs reference"

    # ---- Test 2: forced tiled path with an uneven final F tile -------------
    batch2, seq2, d_model2, ff2 = 2, 64, 128, 320   # F=320 -> last tf tile = 64
    x2 = jax.random.normal(kx2, (batch2, seq2, d_model2), dtype=jnp.float32)
    w1b = jax.random.normal(k3, (ff2, d_model2), dtype=jnp.float32) * (
        1.0 / math.sqrt(d_model2))
    w2b = jax.random.normal(k4, (d_model2, ff2), dtype=jnp.float32) * (
        1.0 / math.sqrt(ff2))
    w1bt, w2bt = w1b.T, w2b.T

    out_t = jax.block_until_ready(
        feed_forward(x2, w1bt, w2bt, tile_m=64, tile_f=256, force_tiled=True))
    ref_t = _reference(x2, w1bt, w2bt)
    assert jnp.allclose(out_t, ref_t.astype(out_t.dtype), atol=1e-2, rtol=1e-2), \
        "f32 tiled-path mismatch vs reference"

    out_t_bf16 = jax.block_until_ready(
        feed_forward(x2.astype(jnp.bfloat16), w1bt.astype(jnp.bfloat16),
                     w2bt.astype(jnp.bfloat16),
                     tile_m=64, tile_f=256, force_tiled=True))
    assert jnp.allclose(out_t_bf16.astype(jnp.float32), ref_t,
                        atol=1.5e-1, rtol=1.5e-1), \
        "bf16 tiled-path mismatch vs reference"

    print("KERNEL_OK")
</pallas_src>

<mosaic_0001>
module attributes {stable_mosaic.version = 11 : i64} {
  func.func @_ffn_resident_kernel(%arg0: i32, %arg1: memref<8x32xf32, #tpu.memory_space<vmem>>, %arg2: memref<32x64xf32, #tpu.memory_space<vmem>>, %arg3: memref<64x32xf32, #tpu.memory_space<vmem>>, %arg4: memref<8x32xf32, #tpu.memory_space<vmem>>) attributes {dimension_semantics = [#tpu.dimension_semantics<parallel>], iteration_bounds = array<i64: 2>, scalar_prefetch = 0 : i64, scratch_operands = 0 : i64, tpu.core_type = #tpu.core_type<tc>, window_params = [{transform_indices = @transform_0, window_bounds = array<i64: 8, 32>}, {pipeline_mode = #tpu.pipeline_mode<synchronous>, transform_indices = @transform_1, window_bounds = array<i64: 32, 64>}, {pipeline_mode = #tpu.pipeline_mode<synchronous>, transform_indices = @transform_2, window_bounds = array<i64: 64, 32>}, {transform_indices = @transform_3, window_bounds = array<i64: 8, 32>}]} {
    %c0 = arith.constant 0 : index
    %c0_0 = arith.constant 0 : index
    %0 = vector.load %arg1[%c0, %c0_0] : memref<8x32xf32, #tpu.memory_space<vmem>>, vector<8x32xf32>
    %c0_1 = arith.constant 0 : index
    %c0_2 = arith.constant 0 : index
    %1 = vector.load %arg2[%c0_1, %c0_2] : memref<32x64xf32, #tpu.memory_space<vmem>>, vector<32x64xf32>
    %cst = arith.constant dense<0.000000e+00> : vector<8x64xf32>
    %2 = tpu.matmul %0, %1, %cst {dimension_numbers = #tpu.dot_dimension_numbers<[1], [0], [0], [1], [0, 0, 1, 1], [], []>} : vector<8x32xf32>, vector<32x64xf32>, vector<8x64xf32> -> vector<8x64xf32>
    %cst_3 = arith.constant 5.000000e-01 : f32
    %3 = vector.broadcast %cst_3 : f32 to vector<8x64xf32>
    %4 = arith.mulf %3, %2 : vector<8x64xf32>
    %cst_4 = arith.constant 0.707106769 : f32
    %5 = vector.broadcast %cst_4 : f32 to vector<8x64xf32>
    %6 = arith.mulf %2, %5 : vector<8x64xf32>
    %7 = math.erf %6 : vector<8x64xf32>
    %cst_5 = arith.constant 1.000000e+00 : f32
    %8 = vector.broadcast %cst_5 : f32 to vector<8x64xf32>
    %9 = arith.addf %8, %7 : vector<8x64xf32>
    %10 = arith.mulf %4, %9 : vector<8x64xf32>
    %c0_6 = arith.constant 0 : index
    %c0_7 = arith.constant 0 : index
    %11 = vector.load %arg3[%c0_6, %c0_7] : memref<64x32xf32, #tpu.memory_space<vmem>>, vector<64x32xf32>
    %cst_8 = arith.constant dense<0.000000e+00> : vector<8x32xf32>
    %12 = tpu.matmul %10, %11, %cst_8 {dimension_numbers = #tpu.dot_dimension_numbers<[1], [0], [0], [1], [0, 0, 1, 1], [], []>} : vector<8x64xf32>, vector<64x32xf32>, vector<8x32xf32> -> vector<8x32xf32>
    %c0_9 = arith.constant 0 : index
    %c0_10 = arith.constant 0 : index
    %13 = vector.load %arg4[%c0_9, %c0_10] : memref<8x32xf32, #tpu.memory_space<vmem>>, vector<8x32xf32>
    tpu.vector_store %arg4[%c0_9, %c0_10], %12 {strides = array<i32>} : memref<8x32xf32, #tpu.memory_space<vmem>>, vector<8x32xf32>,
    return
  }
  func.func @transform_0(%arg0: i32) -> (i32, i32) {
    %c0_i32 = arith.constant 0 : i32
    %c0_i32_0 = arith.constant 0 : i32
    return %arg0, %c0_i32 : i32, i32
  }
  func.func @transform_1(%arg0: i32) -> (i32, i32) {
    %c0_i32 = arith.constant 0 : i32
    %c0_i32_0 = arith.constant 0 : i32
    %c0_i32_1 = arith.constant 0 : i32
    return %c0_i32, %c0_i32_0 : i32, i32
  }
  func.func @transform_2(%arg0: i32) -> (i32, i32) {
    %c0_i32 = arith.constant 0 : i32
    %c0_i32_0 = arith.constant 0 : i32
    %c0_i32_1 = arith.constant 0 : i32
    return %c0_i32, %c0_i32_0 : i32, i32
  }
  func.func @transform_3(%arg0: i32) -> (i32, i32) {
    %c0_i32 = arith.constant 0 : i32
    %c0_i32_0 = arith.constant 0 : i32
    return %arg0, %c0_i32 : i32, i32
  }
}

</mosaic_0001>

<llo_original>
// kernel: tpu_custom_call.1
$region0: #{tpu_custom_call.1}
  #allocation0 [shape = 'u32[]', space=smem, size = 0x4, offset = 0x4, fixed_abs, tag = 'smem constant byte address 0x4 - core index']
  #allocation1 [shape = 'u32[144,128]{1,0:T(1,128)}', space=vmem, size = 0x12000, scoped, tag = 'internal scratch']
  %s0 = inlined_call_operand.vmem [shape: f32[16,32], index: 0, kind: input, shape index: {}]
  %s1 = inlined_call_operand.vmem [shape: f32[32,64], index: 1, kind: input, shape index: {}]
  %s2 = inlined_call_operand.vmem [shape: f32[64,32], index: 2, kind: input, shape index: {}]
  %s3 = inlined_call_operand.hbm [shape: f32[16,32], index: 3, kind: output, shape index: {}]
  %s4 = sld [smem:[#allocation0]]
  $region45: #{tpu_custom_call.1} parent=0
    _
  %s6 = ssub.s32 1, %s4
  %s7 = scalar_select 0, %s6, %s4
  $region1: #{tpu_custom_call.1} parent=0
    #allocation2 [shape = 'u8[8192]{0}', space=vmem, size = 0x2000, scoped, tag = 'output window, operand 0']
    #allocation3 [shape = 's32[2]{0}', space=sflag, size = 0x8, scoped, tag = 'scoped memory for tpu_custom_call.1']
    %8 = vsyncpa [#allocation3], 0
    %s9 = scalar_lea.sflag [#allocation3], 1
    %10 = vsyncpa %s9, 0
    loop: start=0, step=1, limit=4
    $region2: #{tpu_custom_call.1} parent=1 // loop_pre_header
      _
    $region3: #{tpu_custom_call.1} parent=1 // loop_header
      %s12 = sphi 0, %s16
      %p13 = scmp.ge.s32.totalorder %s12, 4
      %s22 = sphi 0, %s24
      %s25 = sphi 0, %s22
      %s26 = sphi 0, %s25
      %s42 = sphi 0, %s26
      %s46 = sphi 0, %s46
      %s48 = sphi 0, %s46
      %s49 = sphi 0, %s48
      %s63 = sphi 0, %s49
      %s67 = sphi 0, %s67
      %s69 = sphi 0, %s67
      %s70 = sphi 0, %s69
      %s84 = sphi 0, %s70
      %s90 = sphi 0, %s92
      %s93 = sphi 0, %s90
      %s94 = sphi 0, %s93
      %s110 = sphi 0, %s94
    $region4: #{tpu_custom_call.1} parent=1 // loop_header_branch
      %15 = sbr.rel (%p13) target = $region8
    $region5: #{tpu_custom_call.1} parent=1 // loop_body
      %s17 = ssub.s32 %s12, 1
      %s18 = ssub.s32 %s12, 2
      %s19 = sadd.s32 %s12, 1
      %s20 = ssub.s32 %s12, %s19
      %p21 = scmp.eq.s32.totalorder %s20, 0
      %s23 = sadd.s32 %s22, 1
      %s24 = scalar_select %p21, %s22, %s23
      %p27 = pneg %p21
      %p28 = scmp.eq.s32.totalorder %s12, 1
      %p29 = por %p27, %p28
      %p30 = scmp.ne.s32.totalorder %s22, %s25
      %p31 = scmp.eq.s32.totalorder %s12, 0
      %p32 = por %p30, %p31
      %p33 = scmp.ne.s32.totalorder %s22, %s25
      %p34 = scmp.eq.s32.totalorder %s17, 1
      %p35 = por %p33, %p34
      %p36 = scmp.ne.s32.totalorder %s25, %s26
      %p37 = scmp.eq.s32.totalorder %s17, 0
      %p38 = por %p36, %p37
      %p39 = scmp.ne.s32.totalorder %s25, %s26
      %p40 = scmp.eq.s32.totalorder %s18, 1
      %p41 = por %p39, %p40
      %p43 = scmp.ne.s32.totalorder %s26, %s42
      %p44 = scmp.eq.s32.totalorder %s18, 0
      %p45 = por %p43, %p44
      %s47 = sadd.s32 %s46, 1
      %p50 = scmp.eq.s32.totalorder %s12, 1
      %p51 = scmp.ne.s32.totalorder %s46, %s48
      %p52 = scmp.eq.s32.totalorder %s12, 0
      %p53 = por %p51, %p52
      %p54 = scmp.ne.s32.totalorder %s46, %s48
      %p55 = scmp.eq.s32.totalorder %s17, 1
      %p56 = por %p54, %p55
      %p57 = scmp.ne.s32.totalorder %s48, %s49
      %p58 = scmp.eq.s32.totalorder %s17, 0
      %p59 = por %p57, %p58
      %p60 = scmp.ne.s32.totalorder %s48, %s49
      %p61 = scmp.eq.s32.totalorder %s18, 1
      %p62 = por %p60, %p61
      %p64 = scmp.ne.s32.totalorder %s49, %s63
      %p65 = scmp.eq.s32.totalorder %s18, 0
      %p66 = por %p64, %p65
      %s68 = sadd.s32 %s67, 1
      %p71 = scmp.eq.s32.totalorder %s12, 1
      %p72 = scmp.ne.s32.totalorder %s67, %s69
      %p73 = scmp.eq.s32.totalorder %s12, 0
      %p74 = por %p72, %p73
      %p75 = scmp.ne.s32.totalorder %s67, %s69
      %p76 = scmp.eq.s32.totalorder %s17, 1
      %p77 = por %p75, %p76
      %p78 = scmp.ne.s32.totalorder %s69, %s70
      %p79 = scmp.eq.s32.totalorder %s17, 0
      %p80 = por %p78, %p79
      %p81 = scmp.ne.s32.totalorder %s69, %s70
      %p82 = scmp.eq.s32.totalorder %s18, 1
      %p83 = por %p81, %p82
      %p85 = scmp.ne.s32.totalorder %s70, %s84
      %p86 = scmp.eq.s32.totalorder %s18, 0
      %p87 = por %p85, %p86
      %s88 = ssub.s32 %s12, %s19
      %p89 = scmp.eq.s32.totalorder %s88, 0
      %s91 = sadd.s32 %s90, 1
      %s92 = scalar_select %p89, %s90, %s91
      %p95 = pneg %p89
      %p96 = scmp.eq.s32.totalorder %s12, 1
      %p97 = por %p95, %p96
      %p98 = scmp.ne.s32.totalorder %s90, %s93
      %p99 = scmp.eq.s32.totalorder %s12, 0
      %p100 = por %p98, %p99
      %p101 = scmp.ne.s32.totalorder %s90, %s93
      %p102 = scmp.eq.s32.totalorder %s17, 1
      %p103 = por %p101, %p102
      %p104 = scmp.ne.s32.totalorder %s93, %s94
      %p105 = scmp.eq.s32.totalorder %s17, 0
      %p106 = por %p104, %p105
      %p107 = scmp.ne.s32.totalorder %s93, %s94
      %p108 = scmp.eq.s32.totalorder %s18, 1
      %p109 = por %p107, %p108
      %p111 = scmp.ne.s32.totalorder %s94, %s110
      %p112 = scmp.eq.s32.totalorder %s18, 0
      %p113 = por %p111, %p112
      %p114 = scmp.le.s32.totalorder 1, %s12
      %p115 = scmp.lt.s32.totalorder %s12, 3
      %p116 = pnand %p114, %p115
      %p117 = pneg %p116
      // Predicated region
      $region9: #{tpu_custom_call.1} parent=5 // pred_check
        _
      $region10: #{tpu_custom_call.1} parent=5 // pred_check_branch
        %119 = sbr.rel (%p116) target = $region12
      $region11: #{tpu_custom_call.1} parent=5 // pred_region
        %s120 = ssub.s32 %s12, 1
        // Predicated region
        $region13: #{tpu_custom_call.1} parent=11 // pred_check
          %p121 = pneg %p59
        $region14: #{tpu_custom_call.1} parent=11 // pred_check_branch
          %123 = sbr.rel (%p121) target = $region16
        $region15: #{tpu_custom_call.1} parent=11 // pred_region
          _
        $region16: #{tpu_custom_call.1} parent=11 // pred_fallthru
          _
        // Predicated region
        $region17: #{tpu_custom_call.1} parent=11 // pred_check
          %p124 = pneg %p80
        $region18: #{tpu_custom_call.1} parent=11 // pred_check_branch
          %126 = sbr.rel (%p124) target = $region20
        $region19: #{tpu_custom_call.1} parent=11 // pred_region
          _
        $region20: #{tpu_custom_call.1} parent=11 // pred_fallthru
          _
      $region12: #{tpu_custom_call.1} parent=5 // pred_fallthru
        _
      %p127 = scmp.lt.s32.totalorder %s12, 2
      // Predicated region
      $region21: #{tpu_custom_call.1} parent=5 // pred_check
        %p128 = pneg %p127
      $region22: #{tpu_custom_call.1} parent=5 // pred_check_branch
        %130 = sbr.rel (%p128) target = $region24
      $region23: #{tpu_custom_call.1} parent=5 // pred_region
        // Predicated region
        $region25: #{tpu_custom_call.1} parent=23 // pred_check
          %p131 = pneg %p32
        $region26: #{tpu_custom_call.1} parent=23 // pred_check_branch
          %133 = sbr.rel (%p131) target = $region28
        $region27: #{tpu_custom_call.1} parent=23 // pred_region
          %p134 = scmp.lt.s32.totalorder %s12, 1
          %s135 = scalar_select %p134, %s12, 1
          %s136 = smul.addr %s135, 8
          %s137 = scalar_lea.vmem %s0, %s136
        $region28: #{tpu_custom_call.1} parent=23 // pred_fallthru
          _
      $region24: #{tpu_custom_call.1} parent=5 // pred_fallthru
        _
      %p138 = scmp.le.s32.totalorder 1, %s12
      %p139 = scmp.lt.s32.totalorder %s12, 3
      %p140 = pnand %p138, %p139
      %p141 = pneg %p140
      // Predicated region
      $region29: #{tpu_custom_call.1} parent=5 // pred_check
        _
      $region30: #{tpu_custom_call.1} parent=5 // pred_check_branch
        %143 = sbr.rel (%p140) target = $region32
      $region31: #{tpu_custom_call.1} parent=5 // pred_region
        %s144 = ssub.s32 %s12, 1
        %p145 = scmp.lt.s32.totalorder %s17, 1
        %s146 = scalar_select %p145, %s17, 1
        %s147 = smul.addr %s146, 8
        %s148 = scalar_lea.vmem %s0, %s147
        %p149 = pneg %p38
        %p150 = pneg %p35
        %p151 = pneg %p59
        %p152 = pneg %p56
        %p153 = pneg %p80
        %p154 = pneg %p77
        %p155 = pneg %p106
        %p156 = pneg %p103
        %s157 = sand.u32 %s93, 1
        %s158 = scalar_lea.sflag [#allocation3], %s157
        %s159 = sand.u32 %s93, 1
        %s160 = smul.addr %s159, 8
        %s161 = scalar_lea.vmem [#allocation2], %s160
        %p162 = scmp.lt.s32.totalorder %s17, 1
        %s163 = scalar_select %p162, %s17, 1
        %s164 = smul.addr %s163, 8
        %s165 = scalar_lea.vmem %s0, %s164
        %v166 = vld [vmem:[%s165] sm:$0xff]
        %v167 = vld [vmem:[%s1] sm:$0xff]
        %v168 = vld [vmem:[%s1 + $0x8] sm:$0xff]
        %v169 = vld [vmem:[%s1 + $0x10] sm:$0xff]
        %v170 = vld [vmem:[%s1 + $0x18] sm:$0xff]
        %vm171 = vcmask 261120
        %v173 = vsel %vm171, %v166, 0
        %175 = vmatprep.subr.mxu0 0.0
        %176 = vmatpush1.msra.mxu0 0.0
        %177 = vmatprep.subr.mxu0 0.0
        %178 = vmatpush1.msra.mxu0 0.0
        %179 = vmatprep.subr.mxu0 0.0
        %180 = vmatpush1.msra.mxu0 0.0
        %181 = vmatprep.subr.mxu0 0.0
        %182 = vmatpush1.msra.mxu0 0.0
        %183 = vmatprep.subr.mxu0 0.0
        %184 = vmatpush1.msra.mxu0 0.0
        %185 = vmatprep.subr.mxu0 0.0
        %186 = vmatpush1.msra.mxu0 0.0
        %187 = vmatprep.subr.mxu0 0.0
        %188 = vmatpush1.msra.mxu0 0.0
        %189 = vmatprep.subr.mxu0 0.0
        %190 = vmatpush1.msra.mxu0 0.0
        %191 = vmatprep.subr.mxu0 0.0
        %192 = vmatpush1.msra.mxu0 0.0
        %193 = vmatprep.subr.mxu0 0.0
        %194 = vmatpush1.msra.mxu0 0.0
        %195 = vmatprep.subr.mxu0 0.0
        %196 = vmatpush1.msra.mxu0 0.0
        %197 = vmatprep.subr.mxu0 0.0
        %198 = vmatpush1.msra.mxu0 0.0
        %199 = vmatprep.subr.mxu0 0.0
        %200 = vmatpush1.msra.mxu0 %v170
        %201 = vmatprep.subr.mxu0 0.0
        %202 = vmatpush1.msra.mxu0 %v169
        %203 = vmatprep.subr.mxu0 0.0
        %204 = vmatpush1.msra.mxu0 %v168
        %205 = vmatprep.subr.mxu0 0.0
        %206 = vmatpush1.msra.mxu0 %v167
        %207 = vmatprep.subr.mxu0 0.0
        %208 = vmatpush2.msra.mxu0 0.0
        %209 = vmatprep.subr.mxu0 0.0
        %210 = vmatpush2.msra.mxu0 0.0
        %211 = vmatprep.subr.mxu0 0.0
        %212 = vmatpush2.msra.mxu0 0.0
        %213 = vmatprep.subr.mxu0 0.0
        %214 = vmatpush2.msra.mxu0 0.0
        %215 = vmatprep.subr.mxu0 0.0
        %216 = vmatpush2.msra.mxu0 0.0
        %217 = vmatprep.subr.mxu0 0.0
        %218 = vmatpush2.msra.mxu0 0.0
        %219 = vmatprep.subr.mxu0 0.0
        %220 = vmatpush2.msra.mxu0 0.0
        %221 = vmatprep.subr.mxu0 0.0
        %222 = vmatpush2.msra.mxu0 0.0
        %223 = vmatprep.subr.mxu0 0.0
        %224 = vmatpush2.msra.mxu0 0.0
        %225 = vmatprep.subr.mxu0 0.0
        %226 = vmatpush2.msra.mxu0 0.0
        %227 = vmatprep.subr.mxu0 0.0
        %228 = vmatpush2.msra.mxu0 0.0
        %229 = vmatprep.subr.mxu0 0.0
        %230 = vmatpush2.msra.mxu0 0.0
        %231 = vmatprep.subr.mxu0 0.0
        %232 = vmatpush2.msra.mxu0 0.0
        %233 = vmatprep.subr.mxu0 0.0
        %234 = vmatpush2.msra.mxu0 0.0
        %235 = vmatprep.subr.mxu0 0.0
        %236 = vmatpush2.msra.mxu0 0.0
        %237 = vmatprep.subr.mxu0 0.0
        %238 = vmatpush2.msra.mxu0 0.0
        %239 = vmatprep.mubr.f32.mxu0 0.0
        %240 = vmatmul.mubr.f32.gmra.mxu0 %v173
        %v241 = vpop.f32.mrf.mxu0
        %v242 = vadd.f32 0.0, %v241
        %v243 = vpop.f32.mrf.mxu0
        %244 = vdwg.mxu0
        %v245 = vmul.f32 %v242, 0.5
        %v246 = vmul.f32 %v242, 0.70710677
        %v247 = verf.f32.pop %v246
        %v248 = vadd.f32 %v247, 1.0
        %v249 = vmul.f32 %v245, %v248
        %v250 = vld [vmem:[%s2] sm:$0xff]
        %v251 = vld [vmem:[%s2 + $0x8] sm:$0xff]
        %v252 = vld [vmem:[%s2 + $0x10] sm:$0xff]
        %v253 = vld [vmem:[%s2 + $0x18] sm:$0xff]
        %v254 = vld [vmem:[%s2 + $0x20] sm:$0xff]
        %v255 = vld [vmem:[%s2 + $0x28] sm:$0xff]
        %v256 = vld [vmem:[%s2 + $0x30] sm:$0xff]
        %v257 = vld [vmem:[%s2 + $0x38] sm:$0xff]
        %vm258 = vcmask 523264
        %v260 = vsel %vm258, %v249, 0
        %262 = vmatprep.subr.mxu0 0.0
        %263 = vmatpush1.msra.mxu0 0.0
        %264 = vmatprep.subr.mxu0 0.0
        %265 = vmatpush1.msra.mxu0 0.0
        %266 = vmatprep.subr.mxu0 0.0
        %267 = vmatpush1.msra.mxu0 0.0
        %268 = vmatprep.subr.mxu0 0.0
        %269 = vmatpush1.msra.mxu0 0.0
        %270 = vmatprep.subr.mxu0 0.0
        %271 = vmatpush1.msra.mxu0 0.0
        %272 = vmatprep.subr.mxu0 0.0
        %273 = vmatpush1.msra.mxu0 0.0
        %274 = vmatprep.subr.mxu0 0.0
        %275 = vmatpush1.msra.mxu0 0.0
        %276 = vmatprep.subr.mxu0 0.0
        %277 = vmatpush1.msra.mxu0 0.0
        %278 = vmatprep.subr.mxu0 0.0
        %279 = vmatpush1.msra.mxu0 %v257
        %280 = vmatprep.subr.mxu0 0.0
        %281 = vmatpush1.msra.mxu0 %v256
        %282 = vmatprep.subr.mxu0 0.0
        %283 = vmatpush1.msra.mxu0 %v255
        %284 = vmatprep.subr.mxu0 0.0
        %285 = vmatpush1.msra.mxu0 %v254
        %286 = vmatprep.subr.mxu0 0.0
        %287 = vmatpush1.msra.mxu0 %v253
        %288 = vmatprep.subr.mxu0 0.0
        %289 = vmatpush1.msra.mxu0 %v252
        %290 = vmatprep.subr.mxu0 0.0
        %291 = vmatpush1.msra.mxu0 %v251
        %292 = vmatprep.subr.mxu0 0.0
        %293 = vmatpush1.msra.mxu0 %v250
        %294 = vmatprep.subr.mxu0 0.0
        %295 = vmatpush2.msra.mxu0 0.0
        %296 = vmatprep.subr.mxu0 0.0
        %297 = vmatpush2.msra.mxu0 0.0
        %298 = vmatprep.subr.mxu0 0.0
        %299 = vmatpush2.msra.mxu0 0.0
        %300 = vmatprep.subr.mxu0 0.0
        %301 = vmatpush2.msra.mxu0 0.0
        %302 = vmatprep.subr.mxu0 0.0
        %303 = vmatpush2.msra.mxu0 0.0
        %304 = vmatprep.subr.mxu0 0.0
        %305 = vmatpush2.msra.mxu0 0.0
        %306 = vmatprep.subr.mxu0 0.0
        %307 = vmatpush2.msra.mxu0 0.0
        %308 = vmatprep.subr.mxu0 0.0
        %309 = vmatpush2.msra.mxu0 0.0
        %310 = vmatprep.subr.mxu0 0.0
        %311 = vmatpush2.msra.mxu0 0.0
        %312 = vmatprep.subr.mxu0 0.0
        %313 = vmatpush2.msra.mxu0 0.0
        %314 = vmatprep.subr.mxu0 0.0
        %315 = vmatpush2.msra.mxu0 0.0
        %316 = vmatprep.subr.mxu0 0.0
        %317 = vmatpush2.msra.mxu0 0.0
        %318 = vmatprep.subr.mxu0 0.0
        %319 = vmatpush2.msra.mxu0 0.0
        %320 = vmatprep.subr.mxu0 0.0
        %321 = vmatpush2.msra.mxu0 0.0
        %322 = vmatprep.subr.mxu0 0.0
        %323 = vmatpush2.msra.mxu0 0.0
        %324 = vmatprep.subr.mxu0 0.0
        %325 = vmatpush2.msra.mxu0 0.0
        %326 = vmatprep.mubr.f32.mxu0 0.0
        %327 = vmatmul.mubr.f32.gmra.mxu0 %v260
        %v328 = vpop.f32.mrf.mxu0
        %v329 = vadd.f32 0.0, %v328
        %v330 = vpop.f32.mrf.mxu0
        %331 = vdwg.mxu0
        %332 = vst.msk [vmem:[%s161] sm:$0xff] %vm171, %v329
        %s333 = sand.u32 %s93, 1
        %s334 = scalar_lea.sflag [#allocation3], %s333
        %s335 = sand.u32 %s93, 1
        %s336 = smul.addr %s335, 8
        %s337 = scalar_lea.vmem [#allocation2], %s336
        // Predicated region
        $region33: #{tpu_custom_call.1} parent=31 // pred_check
          %p338 = pneg %p103
        $region34: #{tpu_custom_call.1} parent=31 // pred_check_branch
          %340 = sbr.rel (%p338) target = $region36
        $region35: #{tpu_custom_call.1} parent=31 // pred_region
          %s342 = ssub.s32 128, 128
          %343 = vsyncadd %s334, %s342
          %s344 = smul.addr %s17, 128
          %s345 = scalar_lea.hbm %s3, %s344
          %s347 = sshll.u32 %s337, 4
          %s348 = int_to_ptr.vmem [resolvable:$true] %s347
          %350 = dma.vmem_to_hbm [thread:$0]  %s348, 128, %s345, %s334
        $region36: #{tpu_custom_call.1} parent=31 // pred_fallthru
          _
      $region32: #{tpu_custom_call.1} parent=5 // pred_fallthru
        _
      %p351 = scmp.le.s32.totalorder 2, %s12
      // Predicated region
      $region37: #{tpu_custom_call.1} parent=5 // pred_check
        %p352 = pneg %p351
      $region38: #{tpu_custom_call.1} parent=5 // pred_check_branch
        %354 = sbr.rel (%p352) target = $region40
      $region39: #{tpu_custom_call.1} parent=5 // pred_region
        %s355 = ssub.s32 %s12, 2
        // Predicated region
        $region41: #{tpu_custom_call.1} parent=39 // pred_check
          %p356 = pneg %p109
        $region42: #{tpu_custom_call.1} parent=39 // pred_check_branch
          %358 = sbr.rel (%p356) target = $region44
        $region43: #{tpu_custom_call.1} parent=39 // pred_region
          %s359 = sand.u32 %s94, 1
          %s360 = scalar_lea.sflag [#allocation3], %s359
          %s361 = sand.u32 %s94, 1
          %s362 = smul.addr %s361, 8
          %s363 = scalar_lea.vmem [#allocation2], %s362
          %364 = dma.done %s360, 128
        $region44: #{tpu_custom_call.1} parent=39 // pred_fallthru
          _
      $region40: #{tpu_custom_call.1} parent=5 // pred_fallthru
        _
    $region6: #{tpu_custom_call.1} parent=1 // loop_footer
      %s16 = sadd.s32 1, %s12
    $region7: #{tpu_custom_call.1} parent=1 // loop_footer_branch
      %11 = sbr.rel target = $region3
    $region8: #{tpu_custom_call.1} parent=1 // loop_exit
      _
    %365 = vsyncpa [#allocation3], 1
    %s366 = scalar_lea.sflag [#allocation3], 1
    %367 = vsyncpa %s366, 1

</llo_original>
